<compile_context>
chip_gen: v7x
topology: tpu7x:2x2x1
jax: 0.10.0
libtpu: 0.0.40
codegen_flags: <defaults>
</compile_context>

<pallas_src>
import numpy as np
import jax
import jax.numpy as jnp
from jax.experimental import pallas as pl
from jax.experimental.pallas import tpu as pltpu


def _round_up(x, m):
    return ((x + m - 1) // m) * m


def _modularity_batch_kernel(nti_ref, ntj_ref, res_ref,   # scalar-prefetch (SMEM)
                             a_ref, p_ref,                 # tiled inputs (VMEM)
                             out_ref,                      # output (VMEM)
                             acc_ap, acc_s, acc_q1):       # scratch (VMEM)
    """Grid = (graph g, row tile i, contraction tile j)."""
    g = pl.program_id(0)
    i = pl.program_id(1)
    j = pl.program_id(2)

    TM = acc_ap.shape[0]
    TK = a_ref.shape[2]

    nti = nti_ref[g]                      # valid row tiles for this graph
    ntj = ntj_ref[g]                      # valid contraction tiles
    valid = (i < nti) & (j < ntj)

    # ---- per-graph reset of the scalar / vector accumulators ----------------
    @pl.when((i == 0) & (j == 0))
    def _():
        acc_s[...] = jnp.zeros_like(acc_s)
        acc_q1[...] = jnp.zeros_like(acc_q1)

    # ---- per-row-block reset of the AP accumulator ---------------------------
    @pl.when(valid & (j == 0))
    def _():
        acc_ap[...] = jnp.zeros_like(acc_ap)

    # ---- MXU: accumulate A[i, j] @ P_aug[j] over the contraction axis --------
    @pl.when(valid)
    def _():
        pj = p_ref[0, pl.ds(pl.multiple_of(j * TK, TK), TK), :]   # (TK, KP) slice of resident P
        acc_ap[...] += jnp.dot(a_ref[0].astype(jnp.float32), pj,
                               preferred_element_type=jnp.float32)

    # ---- row-block finalize: fold the completed AP rows into per-graph sums --
    @pl.when(valid & (j == ntj - 1))
    def _():
        ap = acc_ap[...]                   # (TM, KP): [:, :K] = A@P, [:, -1] = d
        pi = p_ref[0, pl.ds(pl.multiple_of(i * TM, TM), TM), :]   # (TM, KP) P_aug rows of block i
        d = ap[:, -1:]                     # (TM, 1) degrees of this row block
        # Tr(P^T A P) contribution: sum(ap*pi) includes d_i * ones-column -> subtract
        acc_q1[...] += (jnp.sum(ap * pi, keepdims=True)
                        - jnp.sum(d, keepdims=True))
        # s = d^T P_aug ; its last lane accumulates m2 = sum(d)
        acc_s[...] += jnp.sum(d * pi, axis=0, keepdims=True)

    # ---- graph finalize -------------------------------------------------------
    @pl.when((i == nti - 1) & (j == ntj - 1))
    def _():
        s = acc_s[...]                                   # (1, KP)
        m2 = s[:, -1:]                                   # (1, 1) = 2m
        q1 = acc_q1[...]                                 # (1, 1) = Tr(P^T A P)
        ss = jnp.sum(s * s, axis=-1, keepdims=True) - m2 * m2   # sum_k (d^T P)_k^2
        res = res_ref[g]
        inv = 1.0 / jnp.maximum(m2, 1e-12)
        q = (q1 - res * inv * ss) * inv
        q = jnp.where(m2 > 0.0, q, jnp.zeros_like(q))    # empty-graph guard
        out_ref[...] = q.reshape(1, 1, 1)


def modularity_batched(all_A, all_P, resolutions):
    """All graphs in a single pallas_call; returns a (G,) vector of modularities."""
    G = len(all_A)
    sizes = [int(np.asarray(A).shape[0]) for A in all_A]
    ks = [int(np.asarray(P).shape[1]) for P in all_P]
    max_N = max(sizes)
    max_K = max(ks)
    KP = max(128, _round_up(max_K + 1, 128))   # lane-padded, last column = ones

    # Tile selection: single tile for small graphs, 512x2048 bf16 panels otherwise.
    if max_N <= 1024:
        Np = _round_up(max_N, 8)
        TM = TK = Np
    else:
        TM, TK = 512, 2048
        Np = _round_up(max_N, TK)

    # ---- host-side batching / zero-padding in NumPy, one bulk transfer ------
    A_np = np.zeros((G, Np, Np), dtype=np.float32)
    P_np = np.zeros((G, Np, KP), dtype=np.float32)
    nti_np = np.zeros((G,), dtype=np.int32)
    ntj_np = np.zeros((G,), dtype=np.int32)
    for g, (A, P) in enumerate(zip(all_A, all_P)):
        A = np.asarray(A, dtype=np.float32)
        P = np.asarray(P, dtype=np.float32)
        n, k = int(A.shape[0]), int(P.shape[1])
        A_np[g, :n, :n] = A
        P_np[g, :n, :k] = P
        P_np[g, :n, KP - 1] = 1.0                       # ones column -> degrees on MXU
        nti_np[g] = max(1, -(-n // TM))                 # ceil(n / TM)
        ntj_np[g] = max(1, -(-n // TK))                 # ceil(n / TK)

    A_b = jnp.asarray(A_np, dtype=jnp.bfloat16)          # 0/1 adjacency exact in bf16
    P_b = jnp.asarray(P_np, dtype=jnp.float32)
    res_b = jnp.asarray(np.asarray(resolutions, dtype=np.float32))
    nti_b = jnp.asarray(nti_np)
    ntj_b = jnp.asarray(ntj_np)

    # ---- index maps (receive the scalar-prefetch refs positionally) ----------
    def a_index_map(g, i, j, nti_ref, ntj_ref, res_ref):
        # Clamp out-of-range tiles to the last valid block so the pipeline
        # re-uses the resident buffer and issues no DMA for skipped steps.
        nti = nti_ref[g]
        ntj = ntj_ref[g]
        row = jnp.minimum(i, nti - 1)
        col = jnp.where(i < nti, jnp.minimum(j, ntj - 1), ntj - 1)
        return (g, row, col)

    def p_index_map(g, i, j, nti_ref, ntj_ref, res_ref):
        return (g, 0, 0)                                 # P_aug resident per graph

    def out_index_map(g, i, j, nti_ref, ntj_ref, res_ref):
        return (g, 0, 0)

    # ---- VMEM budget: 2x A tile (bf16) + 2x resident P + accumulators --------
    need = (2 * TM * TK * 2          # A double buffer (bf16)
            + 2 * Np * KP * 4        # resident P_aug double buffer (f32)
            + TM * KP * 4            # acc_ap
            + KP * 4 + 4 + 8)        # acc_s, acc_q1, out
    vmem_limit = int(min(max(2 * need, 32 * 1024 * 1024), 100 * 1024 * 1024))

    grid = (G, Np // TM, Np // TK)
    kernel = pl.pallas_call(
        _modularity_batch_kernel,
        out_shape=jax.ShapeDtypeStruct((G, 1, 1), jnp.float32),
        grid_spec=pltpu.PrefetchScalarGridSpec(
            num_scalar_prefetch=3,                                   # nti, ntj, res -> SMEM
            grid=grid,
            in_specs=[
                pl.BlockSpec((1, TM, TK), a_index_map),              # A tile (bf16)
                pl.BlockSpec((1, Np, KP), p_index_map),              # P_aug, VMEM-resident per graph
            ],
            out_specs=pl.BlockSpec((1, 1, 1), out_index_map),
            scratch_shapes=[
                pltpu.VMEM((TM, KP), jnp.float32),   # AP accumulator
                pltpu.VMEM((1, KP), jnp.float32),    # s = d^T P_aug accumulator
                pltpu.VMEM((1, 1), jnp.float32),     # Tr(P^T A P) accumulator
            ],
        ),
        compiler_params=pltpu.CompilerParams(
            dimension_semantics=("parallel", "arbitrary", "arbitrary"),
            vmem_limit_bytes=vmem_limit,
        ),
        cost_estimate=pl.CostEstimate(
            flops=2 * G * Np * Np * KP,
            transcendentals=0,
            bytes_accessed=int(G * (Np * Np * 2 + Np * KP * 4 + 4 + 4)),
        ),
    )
    out = kernel(nti_b, ntj_b, res_b, A_b, P_b)
    return out.reshape(G)


def modularity_loss(all_A, all_P, resolutions):
    """JAX/Pallas equivalent of ModularityLoss.forward."""
    mods = modularity_batched(all_A, all_P, resolutions)   # (G,) device array
    loss = jnp.sum(mods).reshape(1)                        # mirrors torch.tensor([0]) accumulation
    mods_host = jax.device_get(mods)                       # ONE host round-trip for all graphs
    loss_list = [float(v) for v in mods_host]
    return loss, loss_list


# ----------------------------- test harness ----------------------------------

def _make_graph(key, n, k):
    """Deterministic synthetic symmetric adjacency + soft assignment."""
    k1, k2 = jax.random.split(key)
    raw = (jax.random.uniform(k1, (n, n)) > 0.5).astype(jnp.float32)
    A = jnp.maximum(raw, raw.T)                    # symmetric 0/1 adjacency
    A = A * (1.0 - jnp.eye(n, dtype=jnp.float32))  # zero diagonal
    logits = jax.random.normal(k2, (n, k))
    P = jax.nn.softmax(logits, axis=-1)            # rows sum to 1
    return A, P


def _modularity_ref_np(A, P, res):
    """float64 NumPy reference of the standard resolution-scaled modularity."""
    A = np.asarray(A, np.float64)
    P = np.asarray(P, np.float64)
    d = A.sum(axis=1, keepdims=True)
    m2 = A.sum()
    if m2 == 0:
        return 0.0
    B = A - res * (d @ d.T) / m2
    return float(np.trace(P.T @ B @ P) / m2)


if __name__ == "__main__":
    key = jax.random.PRNGKey(0)
    kg1, kg2 = jax.random.split(key)

    # Two small graphs (hierarchy levels), as the module's list inputs imply.
    A1, P1 = _make_graph(kg1, n=16, k=4)
    A2, P2 = _make_graph(kg2, n=32, k=8)

    all_A = [A1, A2]
    all_P = [P1, P2]
    resolutions = [1.0, 0.5]

    loss, loss_list = modularity_loss(all_A, all_P, resolutions)
    loss = jax.block_until_ready(loss)

    assert loss.shape == (1,)
    assert len(loss_list) == 2
    assert all(isinstance(v, float) for v in loss_list)
    assert np.all(np.isfinite(np.asarray(loss_list)))

    # Sanity check against a float64 NumPy reference (loose tolerance: MXU
    # default precision rounds P to bf16; A/d are exact 0/1 accumulated in f32).
    refs = [_modularity_ref_np(A, P, r) for A, P, r in zip(all_A, all_P, resolutions)]
    np.testing.assert_allclose(np.asarray(loss_list), np.asarray(refs),
                               rtol=5e-2, atol=2e-3)
    np.testing.assert_allclose(float(loss[0]), float(np.sum(refs)),
                               rtol=5e-2, atol=4e-3)

    print("KERNEL_OK")
</pallas_src>

<mosaic_0001>
module attributes {stable_mosaic.version = 11 : i64} {
  func.func @_modularity_batch_kernel(%arg0: i32, %arg1: i32, %arg2: i32, %arg3: memref<2xi32, #tpu.memory_space<smem>>, %arg4: memref<2xi32, #tpu.memory_space<smem>>, %arg5: memref<2xf32, #tpu.memory_space<smem>>, %arg6: memref<1x32x32xbf16, #tpu.memory_space<vmem>>, %arg7: memref<1x32x128xf32, #tpu.memory_space<vmem>>, %arg8: memref<1x1x1xf32, #tpu.memory_space<vmem>>, %arg9: memref<32x128xf32, #tpu.memory_space<vmem>>, %arg10: memref<1x128xf32, #tpu.memory_space<vmem>>, %arg11: memref<1x1xf32, #tpu.memory_space<vmem>>) attributes {dimension_semantics = [#tpu.dimension_semantics<parallel>, #tpu.dimension_semantics<arbitrary>, #tpu.dimension_semantics<arbitrary>], iteration_bounds = array<i64: 2, 1, 1>, scalar_prefetch = 3 : i64, scratch_operands = 3 : i64, tpu.core_type = #tpu.core_type<tc>, window_params = [{transform_indices = @transform_0, window_bounds = array<i64: 1, 32, 32>}, {transform_indices = @transform_1, window_bounds = array<i64: 1, 32, 128>}, {transform_indices = @transform_2, window_bounds = array<i64: 1, 1, 1>}]} {
    %0 = arith.index_cast %arg0 : i32 to index
    %1 = memref.load %arg3[%0] : memref<2xi32, #tpu.memory_space<smem>>
    %2 = arith.index_cast %arg0 : i32 to index
    %3 = memref.load %arg4[%2] : memref<2xi32, #tpu.memory_space<smem>>
    %4 = arith.cmpi slt, %arg1, %1 : i32
    %5 = arith.cmpi slt, %arg2, %3 : i32
    %6 = arith.andi %4, %5 : i1
    %c0_i32 = arith.constant 0 : i32
    %7 = arith.cmpi eq, %arg1, %c0_i32 : i32
    %c0_i32_0 = arith.constant 0 : i32
    %8 = arith.cmpi eq, %arg2, %c0_i32_0 : i32
    %9 = arith.andi %7, %8 : i1
    %10 = arith.extui %9 : i1 to i32
    %c0_i32_1 = arith.constant 0 : i32
    %11 = arith.cmpi ne, %10, %c0_i32_1 : i32
    scf.if %11 {
      %cst = arith.constant 0.000000e+00 : f32
      %30 = vector.broadcast %cst : f32 to vector<1x128xf32>
      %c0 = arith.constant 0 : index
      %c0_9 = arith.constant 0 : index
      %31 = vector.load %arg10[%c0, %c0_9] : memref<1x128xf32, #tpu.memory_space<vmem>>, vector<1x128xf32>
      tpu.vector_store %arg10[%c0, %c0_9], %30 {strides = array<i32>} : memref<1x128xf32, #tpu.memory_space<vmem>>, vector<1x128xf32>,
      %cst_10 = arith.constant 0.000000e+00 : f32
      %32 = vector.broadcast %cst_10 : f32 to vector<1x1xf32>
      %c0_11 = arith.constant 0 : index
      %c0_12 = arith.constant 0 : index
      %33 = vector.load %arg11[%c0_11, %c0_12] : memref<1x1xf32, #tpu.memory_space<vmem>>, vector<1x1xf32>
      tpu.vector_store %arg11[%c0_11, %c0_12], %32 {strides = array<i32>} : memref<1x1xf32, #tpu.memory_space<vmem>>, vector<1x1xf32>,
    } else {
    }
    %c0_i32_2 = arith.constant 0 : i32
    %12 = arith.cmpi eq, %arg2, %c0_i32_2 : i32
    %13 = arith.andi %6, %12 : i1
    %14 = arith.extui %13 : i1 to i32
    %c0_i32_3 = arith.constant 0 : i32
    %15 = arith.cmpi ne, %14, %c0_i32_3 : i32
    scf.if %15 {
      %cst = arith.constant 0.000000e+00 : f32
      %30 = vector.broadcast %cst : f32 to vector<32x128xf32>
      %c0 = arith.constant 0 : index
      %c0_9 = arith.constant 0 : index
      %31 = vector.load %arg9[%c0, %c0_9] : memref<32x128xf32, #tpu.memory_space<vmem>>, vector<32x128xf32>
      tpu.vector_store %arg9[%c0, %c0_9], %30 {strides = array<i32>} : memref<32x128xf32, #tpu.memory_space<vmem>>, vector<32x128xf32>,
    } else {
    }
    %16 = arith.extui %6 : i1 to i32
    %c0_i32_4 = arith.constant 0 : i32
    %17 = arith.cmpi ne, %16, %c0_i32_4 : i32
    scf.if %17 {
      %c32_i32 = arith.constant 32 : i32
      %30 = arith.muli %arg2, %c32_i32 : i32
      %31 = tpu.assume_multiple %30, 32 : i32
      %c0 = arith.constant 0 : index
      %32 = arith.index_cast %31 : i32 to index
      %c0_9 = arith.constant 0 : index
      %33 = vector.load %arg7[%c0, %32, %c0_9] : memref<1x32x128xf32, #tpu.memory_space<vmem>>, vector<1x32x128xf32>
      %34 = vector.shape_cast %33 : vector<1x32x128xf32> to vector<32x128xf32>
      %c0_10 = arith.constant 0 : index
      %c0_11 = arith.constant 0 : index
      %35 = vector.load %arg9[%c0_10, %c0_11] : memref<32x128xf32, #tpu.memory_space<vmem>>, vector<32x128xf32>
      %c0_12 = arith.constant 0 : index
      %c0_13 = arith.constant 0 : index
      %c0_14 = arith.constant 0 : index
      %36 = vector.load %arg6[%c0_12, %c0_13, %c0_14] : memref<1x32x32xbf16, #tpu.memory_space<vmem>>, vector<1x32x32xbf16>
      %37 = vector.shape_cast %36 : vector<1x32x32xbf16> to vector<32x32xbf16>
      %38 = arith.extf %37 : vector<32x32xbf16> to vector<32x32xf32>
      %cst = arith.constant dense<0.000000e+00> : vector<32x128xf32>
      %39 = tpu.matmul %38, %34, %cst {dimension_numbers = #tpu.dot_dimension_numbers<[1], [0], [0], [1], [0, 0, 1, 1], [], []>} : vector<32x32xf32>, vector<32x128xf32>, vector<32x128xf32> -> vector<32x128xf32>
      %40 = arith.addf %35, %39 : vector<32x128xf32>
      %c0_15 = arith.constant 0 : index
      %c0_16 = arith.constant 0 : index
      %41 = vector.load %arg9[%c0_15, %c0_16] : memref<32x128xf32, #tpu.memory_space<vmem>>, vector<32x128xf32>
      tpu.vector_store %arg9[%c0_15, %c0_16], %40 {strides = array<i32>} : memref<32x128xf32, #tpu.memory_space<vmem>>, vector<32x128xf32>,
    } else {
    }
    %c1_i32 = arith.constant 1 : i32
    %18 = arith.subi %3, %c1_i32 : i32
    %19 = arith.cmpi eq, %arg2, %18 : i32
    %20 = arith.andi %6, %19 : i1
    %21 = arith.extui %20 : i1 to i32
    %c0_i32_5 = arith.constant 0 : i32
    %22 = arith.cmpi ne, %21, %c0_i32_5 : i32
    scf.if %22 {
      %c0 = arith.constant 0 : index
      %c0_9 = arith.constant 0 : index
      %30 = vector.load %arg9[%c0, %c0_9] : memref<32x128xf32, #tpu.memory_space<vmem>>, vector<32x128xf32>
      %c32_i32 = arith.constant 32 : i32
      %31 = arith.muli %arg1, %c32_i32 : i32
      %32 = tpu.assume_multiple %31, 32 : i32
      %c0_10 = arith.constant 0 : index
      %33 = arith.index_cast %32 : i32 to index
      %c0_11 = arith.constant 0 : index
      %34 = vector.load %arg7[%c0_10, %33, %c0_11] : memref<1x32x128xf32, #tpu.memory_space<vmem>>, vector<1x32x128xf32>
      %35 = vector.shape_cast %34 : vector<1x32x128xf32> to vector<32x128xf32>
      %36 = vector.extract_strided_slice %30 {offsets = [0, 127], sizes = [32, 1], strides = [1, 1]} : vector<32x128xf32> to vector<32x1xf32>
      %c0_12 = arith.constant 0 : index
      %c0_13 = arith.constant 0 : index
      %37 = vector.load %arg11[%c0_12, %c0_13] : memref<1x1xf32, #tpu.memory_space<vmem>>, vector<1x1xf32>
      %38 = arith.mulf %30, %35 : vector<32x128xf32>
      %39 = vector.shape_cast %38 : vector<32x128xf32> to vector<1x32x128xf32>
      %cst = arith.constant dense<0.000000e+00> : vector<1xf32>
      %40 = vector.multi_reduction <add>, %39, %cst [1, 2] : vector<1x32x128xf32> to vector<1xf32>
      %41 = vector.shape_cast %40 : vector<1xf32> to vector<1x1x1xf32>
      %42 = vector.extract %41[0, 0, 0] : f32 from vector<1x1x1xf32>
      %43 = vector.broadcast %42 : f32 to vector<1x1xf32>
      %44 = vector.shape_cast %36 : vector<32x1xf32> to vector<1x32x1xf32>
      %cst_14 = arith.constant dense<0.000000e+00> : vector<1xf32>
      %45 = vector.multi_reduction <add>, %44, %cst_14 [1, 2] : vector<1x32x1xf32> to vector<1xf32>
      %46 = vector.shape_cast %45 : vector<1xf32> to vector<1x1x1xf32>
      %47 = vector.extract %46[0, 0, 0] : f32 from vector<1x1x1xf32>
      %48 = vector.broadcast %47 : f32 to vector<1x1xf32>
      %49 = arith.subf %43, %48 : vector<1x1xf32>
      %50 = arith.addf %37, %49 : vector<1x1xf32>
      %c0_15 = arith.constant 0 : index
      %c0_16 = arith.constant 0 : index
      %51 = vector.load %arg11[%c0_15, %c0_16] : memref<1x1xf32, #tpu.memory_space<vmem>>, vector<1x1xf32>
      tpu.vector_store %arg11[%c0_15, %c0_16], %50 {strides = array<i32>} : memref<1x1xf32, #tpu.memory_space<vmem>>, vector<1x1xf32>,
      %c0_17 = arith.constant 0 : index
      %c0_18 = arith.constant 0 : index
      %52 = vector.load %arg10[%c0_17, %c0_18] : memref<1x128xf32, #tpu.memory_space<vmem>>, vector<1x128xf32>
      %53 = vector.broadcast %36 : vector<32x1xf32> to vector<32x128xf32>
      %54 = arith.mulf %53, %35 : vector<32x128xf32>
      %cst_19 = arith.constant dense<0.000000e+00> : vector<128xf32>
      %55 = vector.multi_reduction <add>, %54, %cst_19 [0] : vector<32x128xf32> to vector<128xf32>
      %56 = vector.shape_cast %55 : vector<128xf32> to vector<1x128xf32>
      %57 = arith.addf %52, %56 : vector<1x128xf32>
      %c0_20 = arith.constant 0 : index
      %c0_21 = arith.constant 0 : index
      %58 = vector.load %arg10[%c0_20, %c0_21] : memref<1x128xf32, #tpu.memory_space<vmem>>, vector<1x128xf32>
      tpu.vector_store %arg10[%c0_20, %c0_21], %57 {strides = array<i32>} : memref<1x128xf32, #tpu.memory_space<vmem>>, vector<1x128xf32>,
    } else {
    }
    %c1_i32_6 = arith.constant 1 : i32
    %23 = arith.subi %1, %c1_i32_6 : i32
    %24 = arith.cmpi eq, %arg1, %23 : i32
    %c1_i32_7 = arith.constant 1 : i32
    %25 = arith.subi %3, %c1_i32_7 : i32
    %26 = arith.cmpi eq, %arg2, %25 : i32
    %27 = arith.andi %24, %26 : i1
    %28 = arith.extui %27 : i1 to i32
    %c0_i32_8 = arith.constant 0 : i32
    %29 = arith.cmpi ne, %28, %c0_i32_8 : i32
    scf.if %29 {
      %c0 = arith.constant 0 : index
      %c0_9 = arith.constant 0 : index
      %30 = vector.load %arg10[%c0, %c0_9] : memref<1x128xf32, #tpu.memory_space<vmem>>, vector<1x128xf32>
      %31 = vector.extract_strided_slice %30 {offsets = [0, 127], sizes = [1, 1], strides = [1, 1]} : vector<1x128xf32> to vector<1x1xf32>
      %c0_10 = arith.constant 0 : index
      %c0_11 = arith.constant 0 : index
      %32 = vector.load %arg11[%c0_10, %c0_11] : memref<1x1xf32, #tpu.memory_space<vmem>>, vector<1x1xf32>
      %33 = arith.mulf %30, %30 : vector<1x128xf32>
      %cst = arith.constant dense<0.000000e+00> : vector<1xf32>
      %34 = vector.multi_reduction <add>, %33, %cst [1] : vector<1x128xf32> to vector<1xf32>
      %35 = vector.shape_cast %34 : vector<1xf32> to vector<1x1xf32>
      %36 = arith.mulf %31, %31 : vector<1x1xf32>
      %37 = arith.subf %35, %36 : vector<1x1xf32>
      %38 = arith.index_cast %arg0 : i32 to index
      %39 = memref.load %arg5[%38] : memref<2xf32, #tpu.memory_space<smem>>
      %cst_12 = arith.constant 9.99999996E-13 : f32
      %40 = vector.broadcast %cst_12 : f32 to vector<1x1xf32>
      %41 = arith.maximumf %31, %40 : vector<1x1xf32>
      %cst_13 = arith.constant 1.000000e+00 : f32
      %42 = vector.broadcast %cst_13 : f32 to vector<1x1xf32>
      %43 = arith.divf %42, %41 : vector<1x1xf32>
      %44 = vector.broadcast %39 : f32 to vector<1x1xf32>
      %45 = arith.mulf %44, %43 : vector<1x1xf32>
      %46 = arith.mulf %45, %37 : vector<1x1xf32>
      %47 = arith.subf %32, %46 : vector<1x1xf32>
      %48 = arith.mulf %47, %43 : vector<1x1xf32>
      %cst_14 = arith.constant 0.000000e+00 : f32
      %49 = vector.broadcast %cst_14 : f32 to vector<1x1xf32>
      %50 = arith.cmpf ogt, %31, %49 : vector<1x1xf32>
      %cst_15 = arith.constant 0.000000e+00 : f32
      %51 = vector.broadcast %cst_15 : f32 to vector<1x1xf32>
      %52 = arith.select %50, %48, %51 : vector<1x1xi1>, vector<1x1xf32>
      %53 = vector.shape_cast %52 : vector<1x1xf32> to vector<1x1x1xf32>
      %c0_16 = arith.constant 0 : index
      %c0_17 = arith.constant 0 : index
      %c0_18 = arith.constant 0 : index
      %54 = vector.load %arg8[%c0_16, %c0_17, %c0_18] : memref<1x1x1xf32, #tpu.memory_space<vmem>>, vector<1x1x1xf32>
      tpu.vector_store %arg8[%c0_16, %c0_17, %c0_18], %53 {strides = array<i32>} : memref<1x1x1xf32, #tpu.memory_space<vmem>>, vector<1x1x1xf32>,
    } else {
    }
    return
  }
  func.func @transform_0(%arg0: i32, %arg1: i32, %arg2: i32, %arg3: memref<2xi32, #tpu.memory_space<smem>>, %arg4: memref<2xi32, #tpu.memory_space<smem>>, %arg5: memref<2xf32, #tpu.memory_space<smem>>) -> (i32, i32, i32) {
    %0 = arith.index_cast %arg0 : i32 to index
    %1 = memref.load %arg3[%0] : memref<2xi32, #tpu.memory_space<smem>>
    %2 = arith.index_cast %arg0 : i32 to index
    %3 = memref.load %arg4[%2] : memref<2xi32, #tpu.memory_space<smem>>
    %c1_i32 = arith.constant 1 : i32
    %4 = arith.subi %1, %c1_i32 : i32
    %5 = arith.minsi %arg1, %4 : i32
    %6 = arith.cmpi slt, %arg1, %1 : i32
    %c1_i32_0 = arith.constant 1 : i32
    %7 = arith.subi %3, %c1_i32_0 : i32
    %8 = arith.minsi %arg2, %7 : i32
    %c1_i32_1 = arith.constant 1 : i32
    %9 = arith.subi %3, %c1_i32_1 : i32
    %10 = arith.select %6, %8, %9 : i32
    %c0_i32 = arith.constant 0 : i32
    return %arg0, %5, %10 : i32, i32, i32
  }
  func.func @transform_1(%arg0: i32, %arg1: i32, %arg2: i32, %arg3: memref<2xi32, #tpu.memory_space<smem>>, %arg4: memref<2xi32, #tpu.memory_space<smem>>, %arg5: memref<2xf32, #tpu.memory_space<smem>>) -> (i32, i32, i32) {
    %c0_i32 = arith.constant 0 : i32
    %c0_i32_0 = arith.constant 0 : i32
    %c0_i32_1 = arith.constant 0 : i32
    return %arg0, %c0_i32, %c0_i32_0 : i32, i32, i32
  }
  func.func @transform_2(%arg0: i32, %arg1: i32, %arg2: i32, %arg3: memref<2xi32, #tpu.memory_space<smem>>, %arg4: memref<2xi32, #tpu.memory_space<smem>>, %arg5: memref<2xf32, #tpu.memory_space<smem>>) -> (i32, i32, i32) {
    %c0_i32 = arith.constant 0 : i32
    %c0_i32_0 = arith.constant 0 : i32
    %c0_i32_1 = arith.constant 0 : i32
    return %arg0, %c0_i32, %c0_i32_0 : i32, i32, i32
  }
}

</mosaic_0001>

<llo_original>
// kernel: tpu_custom_call.1
$region0: #{tpu_custom_call.1}
  #allocation0 [shape = 'u32[]', space=smem, size = 0x4, offset = 0x4, fixed_abs, tag = 'smem constant byte address 0x4 - core index']
  #allocation1 [shape = 'u32[144,128]{1,0:T(1,128)}', space=vmem, size = 0x12000, scoped, tag = 'internal scratch']
  #allocation2 [shape = 'f32[32,128]{1,0:T(8,128)}', space=vmem, size = 0x4000, scoped, tag = 'scratch operand']
  #allocation3 [shape = 'f32[1,128]{1,0:T(1,128)}', space=vmem, size = 0x200, scoped, tag = 'scratch operand']
  #allocation4 [shape = 'f32[1,1]{1,0:T(1,128)}', space=vmem, size = 0x200, scoped, tag = 'scratch operand']
  #allocation5 [shape = 's32[1]{0}', space=sflag, size = 0x4, scoped, tag = 'scoped memory for tpu_custom_call.1']
  #allocation6 [shape = 'u8[512]{0}', space=smem, size = 0x200, scoped, tag = 'prefetched SMEM operand 0']
  #allocation7 [shape = 'u8[512]{0}', space=smem, size = 0x200, scoped, tag = 'prefetched SMEM operand 1']
  #allocation8 [shape = 'u8[512]{0}', space=smem, size = 0x200, scoped, tag = 'prefetched SMEM operand 2']
  %s0 = inlined_call_operand.hbm [shape: s32[2], index: 0, kind: input, shape index: {}]
  %s1 = inlined_call_operand.vmem [shape: s32[2], index: 1, kind: input, shape index: {}]
  %s2 = inlined_call_operand.vmem [shape: f32[2], index: 2, kind: input, shape index: {}]
  %s3 = inlined_call_operand.hbm [shape: bf16[2,32,32], index: 3, kind: input, shape index: {}]
  %s4 = inlined_call_operand.hbm [shape: f32[2,32,128], index: 4, kind: input, shape index: {}]
  %s5 = inlined_call_operand.vmem [shape: f32[2,1,1], index: 5, kind: output, shape index: {}]
  %s6 = sld [smem:[#allocation0]]
  $region69: #{tpu_custom_call.1} parent=0
    _
  %s8 = ssub.s32 1, %s6
  %s9 = scalar_select 0, %s8, %s6
  %11 = dma.hbm_to_smem %s0, 16, [#allocation6], [#allocation5]
  %s12 = sshll.u32 %s1, 4
  %s13 = int_to_ptr.vmem [resolvable:$true] %s12
  %15 = dma.vmem_to_smem %s13, 16, [#allocation7], [#allocation5]
  %s16 = sshll.u32 %s2, 4
  %s17 = int_to_ptr.vmem [resolvable:$true] %s16
  %19 = dma.vmem_to_smem %s17, 16, [#allocation8], [#allocation5]
  %20 = dma.done [#allocation5], 48
  %21 = sfence
  $region1: #{tpu_custom_call.1} parent=0
    #allocation9 [shape = 'u8[16384]{0}', space=vmem, size = 0x4000, scoped, tag = 'input window, operand 3']
    #allocation10 [shape = 's32[2]{0}', space=sflag, size = 0x8, scoped, tag = 'scoped memory for tpu_custom_call.1']
    #allocation11 [shape = 'u8[32768]{0}', space=vmem, size = 0x8000, scoped, tag = 'input window, operand 4']
    #allocation12 [shape = 's32[2]{0}', space=sflag, size = 0x8, scoped, tag = 'scoped memory for tpu_custom_call.1']
    %22 = vsyncpa [#allocation10], 0
    %s23 = scalar_lea.sflag [#allocation10], 1
    %24 = vsyncpa %s23, 0
    %25 = vsyncpa [#allocation12], 0
    %s26 = scalar_lea.sflag [#allocation12], 1
    %27 = vsyncpa %s26, 0
    loop: start=0, step=1, limit=4
    $region2: #{tpu_custom_call.1} parent=1 // loop_pre_header
      _
    $region3: #{tpu_custom_call.1} parent=1 // loop_header
      %s29 = sphi 0, %s33
      %p30 = scmp.ge.s32.totalorder %s29, 4
      %s36 = sphi 0, %s55
      %s37 = sphi 0, %s51
      %s38 = sphi 0, %s47
      %s39 = sphi 0, %s36
      %s40 = sphi 0, %s37
      %s41 = sphi 0, %s38
      %s42 = sphi 0, %s39
      %s43 = sphi 0, %s40
      %s44 = sphi 0, %s41
      %s82 = sphi 0, %s84
      %s85 = sphi 0, %s82
      %s86 = sphi 0, %s85
      %s102 = sphi 0, %s86
      %s108 = sphi 0, %s110
      %s111 = sphi 0, %s108
      %s112 = sphi 0, %s111
      %s128 = sphi 0, %s112
      %s134 = sphi 0, %s136
      %s137 = sphi 0, %s134
      %s138 = sphi 0, %s137
      %s154 = sphi 0, %s138
    $region4: #{tpu_custom_call.1} parent=1 // loop_header_branch
      %32 = sbr.rel (%p30) target = $region8
    $region5: #{tpu_custom_call.1} parent=1 // loop_body
      %s34 = ssub.s32 %s29, 1
      %s35 = ssub.s32 %s29, 2
      %s45 = sadd.s32 1, %s38
      %p46 = scmp.ge.s32.totalorder %s45, 1
      %s47 = scalar_select %p46, 0, %s45
      %s48 = sadd.s32 1, %s37
      %s49 = scalar_select %p46, %s48, %s37
      %p50 = scmp.ge.s32.totalorder %s49, 1
      %s51 = scalar_select %p50, 0, %s49
      %s52 = sadd.s32 1, %s36
      %s53 = scalar_select %p50, %s52, %s36
      %p54 = scmp.ge.s32.totalorder %s53, 2
      %s55 = scalar_select %p54, 0, %s53
      %s56 = sld [smem:[#allocation6 + %s36]]
      %s57 = sld [smem:[#allocation7 + %s36]]
      %s58 = ssub.s32 %s56, 1
      %p59 = scmp.lt.s32.totalorder %s37, %s58
      %s60 = scalar_select %p59, %s37, %s58
      %p61 = scmp.lt.s32.totalorder %s37, %s56
      %s62 = ssub.s32 %s57, 1
      %p63 = scmp.lt.s32.totalorder %s38, %s62
      %s64 = scalar_select %p63, %s38, %s62
      %s65 = scalar_select %p61, %s64, %s62
      %s66 = sld [smem:[#allocation6 + %s55]]
      %s67 = sld [smem:[#allocation7 + %s55]]
      %s68 = ssub.s32 %s66, 1
      %p69 = scmp.lt.s32.totalorder %s51, %s68
      %s70 = scalar_select %p69, %s51, %s68
      %p71 = scmp.lt.s32.totalorder %s51, %s66
      %s72 = ssub.s32 %s67, 1
      %p73 = scmp.lt.s32.totalorder %s47, %s72
      %s74 = scalar_select %p73, %s47, %s72
      %s75 = scalar_select %p71, %s74, %s72
      %s76 = ssub.s32 %s36, %s55
      %s77 = ssub.s32 %s60, %s70
      %s78 = sor.u32 %s76, %s77
      %s79 = ssub.s32 %s65, %s75
      %s80 = sor.u32 %s78, %s79
      %p81 = scmp.eq.s32.totalorder %s80, 0
      %s83 = sadd.s32 %s82, 1
      %s84 = scalar_select %p81, %s82, %s83
      %p87 = pneg %p81
      %p88 = scmp.eq.s32.totalorder %s29, 1
      %p89 = por %p87, %p88
      %p90 = scmp.ne.s32.totalorder %s82, %s85
      %p91 = scmp.eq.s32.totalorder %s29, 0
      %p92 = por %p90, %p91
      %p93 = scmp.ne.s32.totalorder %s82, %s85
      %p94 = scmp.eq.s32.totalorder %s34, 1
      %p95 = por %p93, %p94
      %p96 = scmp.ne.s32.totalorder %s85, %s86
      %p97 = scmp.eq.s32.totalorder %s34, 0
      %p98 = por %p96, %p97
      %p99 = scmp.ne.s32.totalorder %s85, %s86
      %p100 = scmp.eq.s32.totalorder %s35, 1
      %p101 = por %p99, %p100
      %p103 = scmp.ne.s32.totalorder %s86, %s102
      %p104 = scmp.eq.s32.totalorder %s35, 0
      %p105 = por %p103, %p104
      %s106 = ssub.s32 %s36, %s55
      %p107 = scmp.eq.s32.totalorder %s106, 0
      %s109 = sadd.s32 %s108, 1
      %s110 = scalar_select %p107, %s108, %s109
      %p113 = pneg %p107
      %p114 = scmp.eq.s32.totalorder %s29, 1
      %p115 = por %p113, %p114
      %p116 = scmp.ne.s32.totalorder %s108, %s111
      %p117 = scmp.eq.s32.totalorder %s29, 0
      %p118 = por %p116, %p117
      %p119 = scmp.ne.s32.totalorder %s108, %s111
      %p120 = scmp.eq.s32.totalorder %s34, 1
      %p121 = por %p119, %p120
      %p122 = scmp.ne.s32.totalorder %s111, %s112
      %p123 = scmp.eq.s32.totalorder %s34, 0
      %p124 = por %p122, %p123
      %p125 = scmp.ne.s32.totalorder %s111, %s112
      %p126 = scmp.eq.s32.totalorder %s35, 1
      %p127 = por %p125, %p126
      %p129 = scmp.ne.s32.totalorder %s112, %s128
      %p130 = scmp.eq.s32.totalorder %s35, 0
      %p131 = por %p129, %p130
      %s132 = ssub.s32 %s36, %s55
      %p133 = scmp.eq.s32.totalorder %s132, 0
      %s135 = sadd.s32 %s134, 1
      %s136 = scalar_select %p133, %s134, %s135
      %p139 = pneg %p133
      %p140 = scmp.eq.s32.totalorder %s29, 1
      %p141 = por %p139, %p140
      %p142 = scmp.ne.s32.totalorder %s134, %s137
      %p143 = scmp.eq.s32.totalorder %s29, 0
      %p144 = por %p142, %p143
      %p145 = scmp.ne.s32.totalorder %s134, %s137
      %p146 = scmp.eq.s32.totalorder %s34, 1
      %p147 = por %p145, %p146
      %p148 = scmp.ne.s32.totalorder %s137, %s138
      %p149 = scmp.eq.s32.totalorder %s34, 0
      %p150 = por %p148, %p149
      %p151 = scmp.ne.s32.totalorder %s137, %s138
      %p152 = scmp.eq.s32.totalorder %s35, 1
      %p153 = por %p151, %p152
      %p155 = scmp.ne.s32.totalorder %s138, %s154
      %p156 = scmp.eq.s32.totalorder %s35, 0
      %p157 = por %p155, %p156
      %p158 = scmp.le.s32.totalorder 1, %s29
      %p159 = scmp.lt.s32.totalorder %s29, 3
      %p160 = pnand %p158, %p159
      %p161 = pneg %p160
      // Predicated region
      $region9: #{tpu_custom_call.1} parent=5 // pred_check
        _
      $region10: #{tpu_custom_call.1} parent=5 // pred_check_branch
        %163 = sbr.rel (%p160) target = $region12
      $region11: #{tpu_custom_call.1} parent=5 // pred_region
        %s164 = ssub.s32 %s29, 1
      $region12: #{tpu_custom_call.1} parent=5 // pred_fallthru
        _
      %p165 = scmp.lt.s32.totalorder %s29, 2
      // Predicated region
      $region13: #{tpu_custom_call.1} parent=5 // pred_check
        %p166 = pneg %p165
      $region14: #{tpu_custom_call.1} parent=5 // pred_check_branch
        %168 = sbr.rel (%p166) target = $region16
      $region15: #{tpu_custom_call.1} parent=5 // pred_region
        // Predicated region
        $region17: #{tpu_custom_call.1} parent=15 // pred_check
          %p169 = pneg %p92
        $region18: #{tpu_custom_call.1} parent=15 // pred_check_branch
          %171 = sbr.rel (%p169) target = $region20
        $region19: #{tpu_custom_call.1} parent=15 // pred_region
          %s172 = sand.u32 %s82, 1
          %s173 = scalar_lea.sflag [#allocation10], %s172
          %s174 = sand.u32 %s82, 1
          %s175 = smul.addr %s174, 16
          %s176 = scalar_lea.vmem [#allocation9], %s175
          %s177 = sld [smem:[#allocation6 + %s36]]
          %s178 = sld [smem:[#allocation7 + %s36]]
          %s179 = ssub.s32 %s177, 1
          %p180 = scmp.lt.s32.totalorder %s37, %s179
          %s181 = scalar_select %p180, %s37, %s179
          %p182 = scmp.lt.s32.totalorder %s37, %s177
          %s183 = ssub.s32 %s178, 1
          %p184 = scmp.lt.s32.totalorder %s38, %s183
          %s185 = scalar_select %p184, %s38, %s183
          %s186 = scalar_select %p182, %s185, %s183
          %s187 = smul.u32 4, %s181
          %s189 = ssub.s32 256, 256
          %190 = vsyncadd %s173, %s189
          %s191 = sadd.s32 %s186, %s187
          %s192 = smul.addr %s36, 4
          %s193 = sadd.s32 %s191, %s192
          %s194 = smul.addr %s193, 64
          %s195 = scalar_lea.hbm %s3, %s194
          %s196 = sshll.u32 %s176, 4
          %s197 = int_to_ptr.vmem [resolvable:$true] %s196
          %202 = dma.hbm_to_vmem [thread:$0]  %s195, 256, %s197, %s173, 64, 64, 4
        $region20: #{tpu_custom_call.1} parent=15 // pred_fallthru
          _
        // Predicated region
        $region21: #{tpu_custom_call.1} parent=15 // pred_check
          %p203 = pneg %p118
        $region22: #{tpu_custom_call.1} parent=15 // pred_check_branch
          %205 = sbr.rel (%p203) target = $region24
        $region23: #{tpu_custom_call.1} parent=15 // pred_region
          %s206 = sand.u32 %s108, 1
          %s207 = scalar_lea.sflag [#allocation12], %s206
          %s208 = sand.u32 %s108, 1
          %s209 = smul.addr %s208, 32
          %s210 = scalar_lea.vmem [#allocation11], %s209
          %s212 = ssub.s32 512, 512
          %213 = vsyncadd %s207, %s212
          %s214 = smul.addr %s36, 4
          %s215 = smul.addr %s214, 128
          %s216 = scalar_lea.hbm %s4, %s215
          %s217 = sshll.u32 %s210, 4
          %s218 = int_to_ptr.vmem [resolvable:$true] %s217
          %223 = dma.hbm_to_vmem [thread:$0]  %s216, 512, %s218, %s207, 128, 128, 8
        $region24: #{tpu_custom_call.1} parent=15 // pred_fallthru
          _
      $region16: #{tpu_custom_call.1} parent=5 // pred_fallthru
        _
      %p224 = scmp.le.s32.totalorder 1, %s29
      %p225 = scmp.lt.s32.totalorder %s29, 3
      %p226 = pnand %p224, %p225
      %p227 = pneg %p226
      // Predicated region
      $region25: #{tpu_custom_call.1} parent=5 // pred_check
        _
      $region26: #{tpu_custom_call.1} parent=5 // pred_check_branch
        %229 = sbr.rel (%p226) target = $region28
      $region27: #{tpu_custom_call.1} parent=5 // pred_region
        %s230 = ssub.s32 %s29, 1
        %s231 = sand.u32 %s85, 1
        %s232 = scalar_lea.sflag [#allocation10], %s231
        %s233 = sand.u32 %s85, 1
        %s234 = smul.addr %s233, 16
        %s235 = scalar_lea.vmem [#allocation9], %s234
        // Predicated region
        $region29: #{tpu_custom_call.1} parent=27 // pred_check
          %p236 = pneg %p98
        $region30: #{tpu_custom_call.1} parent=27 // pred_check_branch
          %238 = sbr.rel (%p236) target = $region32
        $region31: #{tpu_custom_call.1} parent=27 // pred_region
          %239 = dma.done %s232, 256
        $region32: #{tpu_custom_call.1} parent=27 // pred_fallthru
          _
        %s240 = sand.u32 %s111, 1
        %s241 = scalar_lea.sflag [#allocation12], %s240
        %s242 = sand.u32 %s111, 1
        %s243 = smul.addr %s242, 32
        %s244 = scalar_lea.vmem [#allocation11], %s243
        // Predicated region
        $region33: #{tpu_custom_call.1} parent=27 // pred_check
          %p245 = pneg %p124
        $region34: #{tpu_custom_call.1} parent=27 // pred_check_branch
          %247 = sbr.rel (%p245) target = $region36
        $region35: #{tpu_custom_call.1} parent=27 // pred_region
          %248 = dma.done %s241, 512
        $region36: #{tpu_custom_call.1} parent=27 // pred_fallthru
          _
        %s249 = sand.u32 %s85, 1
        %s250 = scalar_lea.sflag [#allocation10], %s249
        %s251 = sand.u32 %s85, 1
        %s252 = smul.addr %s251, 16
        %s253 = scalar_lea.vmem [#allocation9], %s252
        %p254 = pneg %p98
        %p255 = pneg %p95
        %s256 = sand.u32 %s111, 1
        %s257 = scalar_lea.sflag [#allocation12], %s256
        %s258 = sand.u32 %s111, 1
        %s259 = smul.addr %s258, 32
        %s260 = scalar_lea.vmem [#allocation11], %s259
        %p261 = pneg %p124
        %p262 = pneg %p121
        %p263 = pneg %p150
        %p264 = pneg %p147
        %p265 = scmp.lt.s32.totalorder %s39, 1
        %s266 = scalar_select %p265, %s39, 1
        %s267 = scalar_lea.vmem %s5, %s266
        %s268 = sld [smem:[#allocation6 + %s39]]
        %s269 = sld [smem:[#allocation7 + %s39]]
        %s270 = ssub.s32 %s268, 1
        %p271 = scmp.lt.s32.totalorder %s40, %s270
        %s272 = scalar_select %p271, %s40, %s270
        %p273 = scmp.lt.s32.totalorder %s40, %s268
        %s274 = ssub.s32 %s269, 1
        %p275 = scmp.lt.s32.totalorder %s41, %s274
        %s276 = scalar_select %p275, %s41, %s274
        %s277 = scalar_select %p273, %s276, %s274
        %s278 = smul.u32 4, %s272
        %p279 = scmp.lt.s32.totalorder %s39, 1
        %s280 = scalar_select %p279, %s39, 1
        %s281 = scalar_lea.vmem %s5, %s280
        %s282 = sld [smem:[#allocation6 + %s39]]
        %s283 = sld [smem:[#allocation7 + %s39]]
        %p284 = scmp.lt.s32.totalorder %s40, %s282
        %p285 = scmp.lt.s32.totalorder %s41, %s283
        %p286 = pnand %p284, %p285
        %p287 = pneg %p286
        %p288 = scmp.eq.s32.totalorder %s40, 0
        %p289 = scmp.eq.s32.totalorder %s41, 0
        %p290 = pnand %p288, %p289
        %p291 = pneg %p290
        // Predicated region
        $region37: #{tpu_custom_call.1} parent=27 // pred_check
          _
        $region38: #{tpu_custom_call.1} parent=27 // pred_check_branch
          %293 = sbr.rel (%p290) target = $region40
        $region39: #{tpu_custom_call.1} parent=27 // pred_region
          %294 = vst [vmem:[#allocation3] sm:$0x1] 0.0
          %vm295 = vcmask 0
          %296 = vst.msk [vmem:[#allocation4] sm:$0x1] %vm295, 0.0
        $region40: #{tpu_custom_call.1} parent=27 // pred_fallthru
          _
        %p297 = pnand %p287, %p289
        %p298 = pneg %p297
        // Predicated region
        $region41: #{tpu_custom_call.1} parent=27 // pred_check
          _
        $region42: #{tpu_custom_call.1} parent=27 // pred_check_branch
          %300 = sbr.rel (%p297) target = $region44
        $region43: #{tpu_custom_call.1} parent=27 // pred_region
          %301 = vst [vmem:[#allocation2] sm:$0xff] 0.0
          %302 = vst [vmem:[#allocation2 + $0x8] sm:$0xff] 0.0
          %303 = vst [vmem:[#allocation2 + $0x10] sm:$0xff] 0.0
          %304 = vst [vmem:[#allocation2 + $0x18] sm:$0xff] 0.0
        $region44: #{tpu_custom_call.1} parent=27 // pred_fallthru
          _
        // Predicated region
        $region45: #{tpu_custom_call.1} parent=27 // pred_check
          _
        $region46: #{tpu_custom_call.1} parent=27 // pred_check_branch
          %306 = sbr.rel (%p286) target = $region48
        $region47: #{tpu_custom_call.1} parent=27 // pred_region
          %s307 = smul.u32 %s41, 32
          %s308 = scalar_lea.vmem %s244, %s307 [#allocation11]
          %v309 = vld [vmem:[%s308] sm:$0xff]
          %v310 = vld [vmem:[%s308 + $0x8] sm:$0xff]
          %v311 = vld [vmem:[%s308 + $0x10] sm:$0xff]
          %v312 = vld [vmem:[%s308 + $0x18] sm:$0xff]
          %v313 = vld [vmem:[#allocation2] sm:$0xff]
          %v314 = vld [vmem:[#allocation2 + $0x8] sm:$0xff]
          %v315 = vld [vmem:[#allocation2 + $0x10] sm:$0xff]
          %v316 = vld [vmem:[#allocation2 + $0x18] sm:$0xff]
          %v317 = vld [vmem:[%s235] sm:$0xf]
          %v318 = vld [vmem:[%s235 + $0x4] sm:$0xf]
          %v319 = vld [vmem:[%s235 + $0x8] sm:$0xf]
          %v320 = vld [vmem:[%s235 + $0xc] sm:$0xf]
          %v321 = vunpack.c.l.bf16 %v317
          %v322 = vunpack.c.l.bf16 %v318
          %v323 = vunpack.c.l.bf16 %v319
          %v324 = vunpack.c.l.bf16 %v320
          %vm325 = vcmask 261120
          %v327 = vsel %vm325, %v321, 0
          %v330 = vsel %vm325, %v322, 0
          %v333 = vsel %vm325, %v323, 0
          %v336 = vsel %vm325, %v324, 0
          %338 = vmatprep.subr.mxu0 0.0
          %339 = vmatpush1.msra.mxu0 %v309
          %340 = vmatprep.subr.mxu0 0.0
          %341 = vmatpush1.msra.mxu0 %v310
          %342 = vmatprep.subr.mxu0 0.0
          %343 = vmatpush1.msra.mxu0 %v311
          %344 = vmatprep.subr.mxu0 0.0
          %345 = vmatpush1.msra.mxu0 %v312
          %346 = vmatprep.subr.mxu0 0.0
          %347 = vmatpush1.msra.mxu0 0.0
          %348 = vmatprep.subr.mxu0 0.0
          %349 = vmatpush1.msra.mxu0 0.0
          %350 = vmatprep.subr.mxu0 0.0
          %351 = vmatpush1.msra.mxu0 0.0
          %352 = vmatprep.subr.mxu0 0.0
          %353 = vmatpush1.msra.mxu0 0.0
          %354 = vmatprep.subr.mxu0 0.0
          %355 = vmatpush1.msra.mxu0 0.0
          %356 = vmatprep.subr.mxu0 0.0
          %357 = vmatpush1.msra.mxu0 0.0
          %358 = vmatprep.subr.mxu0 0.0
          %359 = vmatpush1.msra.mxu0 0.0
          %360 = vmatprep.subr.mxu0 0.0
          %361 = vmatpush1.msra.mxu0 0.0
          %362 = vmatprep.subr.mxu0 0.0
          %363 = vmatpush1.msra.mxu0 0.0
          %364 = vmatprep.subr.mxu0 0.0
          %365 = vmatpush1.msra.mxu0 0.0
          %366 = vmatprep.subr.mxu0 0.0
          %367 = vmatpush1.msra.mxu0 0.0
          %368 = vmatprep.subr.mxu0 0.0
          %369 = vmatpush1.msra.mxu0 0.0
          %370 = vmatprep.subr.mxu0 0.0
          %371 = vmatpush1.msra.mxu0 0.0
          %372 = vmatprep.subr.mxu0 0.0
          %373 = vmatpush1.msra.mxu0 0.0
          %374 = vmatprep.subr.mxu0 0.0
          %375 = vmatpush1.msra.mxu0 0.0
          %376 = vmatprep.subr.mxu0 0.0
          %377 = vmatpush1.msra.mxu0 0.0
          %378 = vmatprep.subr.mxu0 0.0
          %379 = vmatpush1.msra.mxu0 0.0
          %380 = vmatprep.subr.mxu0 0.0
          %381 = vmatpush1.msra.mxu0 0.0
          %382 = vmatprep.subr.mxu0 0.0
          %383 = vmatpush1.msra.mxu0 0.0
          %384 = vmatprep.subr.mxu0 0.0
          %385 = vmatpush1.msra.mxu0 0.0
          %386 = vmatprep.subr.mxu0 0.0
          %387 = vmatpush1.msra.mxu0 0.0
          %388 = vmatprep.subr.mxu0 0.0
          %389 = vmatpush1.msra.mxu0 0.0
          %390 = vmatprep.subr.mxu0 0.0
          %391 = vmatpush1.msra.mxu0 0.0
          %392 = vmatprep.subr.mxu0 0.0
          %393 = vmatpush1.msra.mxu0 0.0
          %394 = vmatprep.subr.mxu0 0.0
          %395 = vmatpush1.msra.mxu0 0.0
          %396 = vmatprep.subr.mxu0 0.0
          %397 = vmatpush1.msra.mxu0 0.0
          %398 = vmatprep.subr.mxu0 0.0
          %399 = vmatpush1.msra.mxu0 0.0
          %400 = vmatprep.subr.mxu0 0.0
          %401 = vmatpush1.msra.mxu0 0.0
          %402 = vmatprep.mubr.f32.mxu0 0.0
          %403 = vmatmul.mubr.f32.gmra.mrb[0].mxu0 %v327
          %v404 = vpop.f32.mrb[0].mxu0
          %v405 = vadd.f32 0.0, %v404
          %v406 = vpop.f32.mrb[0].mxu0
          %407 = vmatprep.mubr.f32.mxu0 0.0
          %408 = vmatmul.mubr.f32.gmra.mrb[0].mxu0 %v330
          %v409 = vpop.f32.mrb[0].mxu0
          %v410 = vadd.f32 0.0, %v409
          %v411 = vpop.f32.mrb[0].mxu0
          %412 = vmatprep.mubr.f32.mxu0 0.0
          %413 = vmatmul.mubr.f32.gmra.mrb[0].mxu0 %v333
          %v414 = vpop.f32.mrb[0].mxu0
          %v415 = vadd.f32 0.0, %v414
          %v416 = vpop.f32.mrb[0].mxu0
          %417 = vmatprep.mubr.f32.mxu0 0.0
          %418 = vmatmul.mubr.f32.gmra.mrb[0].mxu0 %v336
          %v419 = vpop.f32.mrb[0].mxu0
          %v420 = vadd.f32 0.0, %v419
          %v421 = vpop.f32.mrb[0].mxu0
          %422 = vdwg.mxu0
          %v423 = vadd.f32 %v313, %v405
          %v424 = vadd.f32 %v314, %v410
          %v425 = vadd.f32 %v315, %v415
          %v426 = vadd.f32 %v316, %v420
          %427 = vst [vmem:[#allocation2] sm:$0xff] %v423
          %428 = vst [vmem:[#allocation2 + $0x8] sm:$0xff] %v424
          %429 = vst [vmem:[#allocation2 + $0x10] sm:$0xff] %v425
          %430 = vst [vmem:[#allocation2 + $0x18] sm:$0xff] %v426
        $region48: #{tpu_custom_call.1} parent=27 // pred_fallthru
          _
        %s431 = ssub.s32 %s283, 1
        %p432 = scmp.eq.s32.totalorder %s41, %s431
        %p433 = pnand %p287, %p432
        %p434 = pneg %p433
        // Predicated region
        $region49: #{tpu_custom_call.1} parent=27 // pred_check
          _
        $region50: #{tpu_custom_call.1} parent=27 // pred_check_branch
          %436 = sbr.rel (%p433) target = $region52
        $region51: #{tpu_custom_call.1} parent=27 // pred_region
          %v437 = vld [vmem:[#allocation2] sm:$0xff]
          %v438 = vld [vmem:[#allocation2 + $0x8] sm:$0xff]
          %v439 = vld [vmem:[#allocation2 + $0x10] sm:$0xff]
          %v440 = vld [vmem:[#allocation2 + $0x18] sm:$0xff]
          %s441 = smul.u32 %s40, 32
          %s442 = scalar_lea.vmem %s244, %s441 [#allocation11]
          %v443 = vld [vmem:[%s442] sm:$0xff]
          %v444 = vld [vmem:[%s442 + $0x8] sm:$0xff]
          %v445 = vld [vmem:[%s442 + $0x10] sm:$0xff]
          %v446 = vld [vmem:[%s442 + $0x18] sm:$0xff]
          %v447 = vld [vmem:[#allocation4] sm:$0x1]
          %v448 = vmul.f32 %v437, %v443
          %v449 = vmul.f32 %v438, %v444
          %v450 = vmul.f32 %v439, %v445
          %v451 = vmul.f32 %v440, %v446
          %v452 = vadd.f32 %v448, %v449
          %v453 = vadd.f32 %v452, %v450
          %v454 = vadd.f32 %v453, %v451
          %455 = vadd.xlane.f32.xlu0 %v454
          %v456 = vpop.xlane.xlu0 %455
          %v457 = vrot.slane %v456, 4
          %v458 = vadd.f32 %v456, %v457
          %v459 = vrot.slane %v458, 2
          %v460 = vadd.f32 %v458, %v459
          %v461 = vrot.slane %v460, 1
          %v462 = vadd.f32 %v460, %v461
          %s463 = vtos %v462
          %v464 = vstv %s463
          %469 = vrot.lane.b32.xlu0 %v437, 1
          %v470 = vpop.permute.xlu0 %469
          %471 = vrot.lane.b32.xlu0 %v438, 1
          %v472 = vpop.permute.xlu0 %471
          %473 = vrot.lane.b32.xlu0 %v439, 1
          %v474 = vpop.permute.xlu0 %473
          %475 = vrot.lane.b32.xlu0 %v440, 1
          %v476 = vpop.permute.xlu0 %475
          %vm481 = vcmask 7168
          %v482 = vsel %vm481, %v470, 0.0
          %v483 = vsel %vm481, %v472, 0.0
          %v484 = vadd.f32 %v482, %v483
          %v485 = vsel %vm481, %v474, 0.0
          %v486 = vadd.f32 %v484, %v485
          %v487 = vsel %vm481, %v476, 0.0
          %v488 = vadd.f32 %v486, %v487
          %489 = vadd.xlane.f32.xlu0 %v488
          %v490 = vpop.xlane.xlu0 %489
          %v491 = vrot.slane %v490, 4
          %v492 = vadd.f32 %v490, %v491
          %v493 = vrot.slane %v492, 2
          %v494 = vadd.f32 %v492, %v493
          %v495 = vrot.slane %v494, 1
          %v496 = vadd.f32 %v494, %v495
          %s497 = vtos %v496
          %v498 = vstv %s497
          %v499 = vsub.f32 %v464, %v498
          %v500 = vadd.f32 %v447, %v499
          %vm501 = vcmask 0
          %502 = vst.msk [vmem:[#allocation4] sm:$0x1] %vm501, %v500
          %v503 = vld [vmem:[#allocation3] sm:$0x1]
          %504 = vset.pattern.permute.xlu0 127
          %505 = vperm.xlu0 %504, %v437
          %v506 = vpop.permute.xlu0 %505
          %508 = vset.pattern.permute.xlu0 127
          %509 = vperm.xlu0 %508, %v438
          %v510 = vpop.permute.xlu0 %509
          %512 = vset.pattern.permute.xlu0 127
          %513 = vperm.xlu0 %512, %v439
          %v514 = vpop.permute.xlu0 %513
          %516 = vset.pattern.permute.xlu0 127
          %517 = vperm.xlu0 %516, %v440
          %v518 = vpop.permute.xlu0 %517
          %v520 = vmul.f32 %v506, %v443
          %v521 = vmul.f32 %v510, %v444
          %v522 = vmul.f32 %v514, %v445
          %v523 = vmul.f32 %v518, %v446
          %v524 = vadd.f32 %v520, %v521
          %v525 = vadd.f32 %v524, %v522
          %v526 = vadd.f32 %v525, %v523
          %v527 = vrot.slane %v526, 4
          %v528 = vadd.f32 %v526, %v527
          %v529 = vrot.slane %v528, 2
          %v530 = vadd.f32 %v528, %v529
          %v531 = vrot.slane %v530, 1
          %v532 = vadd.f32 %v530, %v531
          %v533 = vadd.f32 %v503, %v532
          %534 = vst [vmem:[#allocation3] sm:$0x1] %v533
        $region52: #{tpu_custom_call.1} parent=27 // pred_fallthru
          _
        %s535 = ssub.s32 %s282, 1
        %p536 = scmp.eq.s32.totalorder %s40, %s535
        %p537 = pnand %p536, %p432
        %p538 = pneg %p537
        // Predicated region
        $region53: #{tpu_custom_call.1} parent=27 // pred_check
          _
        $region54: #{tpu_custom_call.1} parent=27 // pred_check_branch
          %540 = sbr.rel (%p537) target = $region56
        $region55: #{tpu_custom_call.1} parent=27 // pred_region
          %v541 = vld [vmem:[#allocation3] sm:$0x1]
          %v542 = vld [vmem:[#allocation4] sm:$0x1]
          %v543 = vmul.f32 %v541, %v541
          %vm544 = vcmask 1040384
          %v545 = vsel %vm544, %v543, 0.0
          %546 = vadd.xlane.f32.xlu0 %v545
          %v547 = vpop.xlane.xlu0 %546
          %v549 = vlaneseq
          %v550 = vshrl.u32 %v549, 7
          %v551 = vsub.s32 0, %v550
          %v552 = vrot.slane %v543, %v551
          %553 = vrot.lane.b32.xlu0 %v552, 1
          %v554 = vpop.permute.xlu0 %553
          %v556 = vsub.f32 %v547, %v554
          %s557 = sld [smem:[#allocation8 + %s39]]
          %v558 = vmax.f32 %v541, 1e-12
          %v559 = vrcp.pop %v558
          %v560 = vmul.f32 1.0, %v559
          %v561 = vstv %s557
          %v562 = vmul.f32 %v561, %v560
          %v565 = vunpack.c.l.s4 1966171168
          %v566 = vunpack.c.0.s8 %v565
          %v567 = vlaneseq
          %v568 = vshrl.u32 %v567, 7
          %v569 = vsub.s32 %v566, %v568
          %v570 = vrot.slane %v556, %v569
          %v572 = vunpack.c.l.s4 1966171168
          %v573 = vunpack.c.0.s8 %v572
          %v574 = vlaneseq
          %v575 = vshrl.u32 %v574, 7
          %v576 = vsub.s32 %v573, %v575
          %v577 = vrot.slane %v570, %v576
          %578 = vrot.lane.b32.xlu0 %v577, 127
          %v579 = vpop.permute.xlu0 %578
          %v581 = vmul.f32 %v562, %v579
          %583 = vrot.lane.b32.xlu0 %v581, 1
          %v584 = vpop.permute.xlu0 %583
          %v586 = vsub.f32 %v542, %v584
          %588 = vrot.lane.b32.xlu0 %v560, 1
          %v589 = vpop.permute.xlu0 %588
          %v591 = vmul.f32 %v586, %v589
          %vm592 = vcmp.gt.f32.partialorder %v541, 0.0
          %594 = vrot.lane.b32.xlu0 %v591, 127
          %v595 = vpop.permute.xlu0 %594
          %v597 = vsel %vm592, %v595, 0.0
          %v599 = vlaneseq
          %v600 = vshrl.u32 %v599, 7
          %v601 = vsub.s32 0, %v600
          %v602 = vrot.slane %v597, %v601
          %603 = vrot.lane.b32.xlu0 %v602, 1
          %v604 = vpop.permute.xlu0 %603
          %vm606 = vcmask 0
          %607 = vst.msk [vmem:[%s281] sm:$0x1] %vm606, %v604
        $region56: #{tpu_custom_call.1} parent=27 // pred_fallthru
          _
        %p608 = scmp.lt.s32.totalorder %s39, 1
        %s609 = scalar_select %p608, %s39, 1
        %s610 = scalar_lea.vmem %s5, %s609
        // Predicated region
        $region57: #{tpu_custom_call.1} parent=27 // pred_check
          %p611 = pneg %p147
        $region58: #{tpu_custom_call.1} parent=27 // pred_check_branch
          %613 = sbr.rel (%p611) target = $region60
        $region59: #{tpu_custom_call.1} parent=27 // pred_region
          _
        $region60: #{tpu_custom_call.1} parent=27 // pred_fallthru
          _
      $region28: #{tpu_custom_call.1} parent=5 // pred_fallthru
        _
      %p614 = scmp.le.s32.totalorder 2, %s29
      // Predicated region
      $region61: #{tpu_custom_call.1} parent=5 // pred_check
        %p615 = pneg %p614
      $region62: #{tpu_custom_call.1} parent=5 // pred_check_branch
        %617 = sbr.rel (%p615) target = $region64
      $region63: #{tpu_custom_call.1} parent=5 // pred_region
        %s618 = ssub.s32 %s29, 2
        // Predicated region
        $region65: #{tpu_custom_call.1} parent=63 // pred_check
          %p619 = pneg %p153
        $region66: #{tpu_custom_call.1} parent=63 // pred_check_branch
          %621 = sbr.rel (%p619) target = $region68
        $region67: #{tpu_custom_call.1} parent=63 // pred_region
          %p622 = scmp.lt.s32.totalorder %s42, 1
          %s623 = scalar_select %p622, %s42, 1
          %s624 = scalar_lea.vmem %s5, %s623
        $region68: #{tpu_custom_call.1} parent=63 // pred_fallthru
          _
      $region64: #{tpu_custom_call.1} parent=5 // pred_fallthru
        _
    $region6: #{tpu_custom_call.1} parent=1 // loop_footer
      %s33 = sadd.s32 1, %s29
    $region7: #{tpu_custom_call.1} parent=1 // loop_footer_branch
      %28 = sbr.rel target = $region3
    $region8: #{tpu_custom_call.1} parent=1 // loop_exit
      _
    %625 = vsyncpa [#allocation10], 1
    %s626 = scalar_lea.sflag [#allocation10], 1
    %627 = vsyncpa %s626, 1
    %628 = vsyncpa [#allocation12], 1
    %s629 = scalar_lea.sflag [#allocation12], 1
    %630 = vsyncpa %s629, 1

</llo_original>
